<compile_context>
chip_gen: v7x
topology: tpu7x:2x2x1
jax: 0.10.0
libtpu: 0.0.40
codegen_flags: <defaults>
</compile_context>

<pallas_src>
import jax
import jax.numpy as jnp
from jax.experimental import pallas as pl
from jax.experimental.pallas import tpu as pltpu

_LANES = 128
_WIDTH_CANDIDATES = (4096, 2048, 1024, 512, 256, 128)


# --------------------------------------------------------------------------- #
# Hardware-aware configuration (trace-time host lookups, safe under jit).
# --------------------------------------------------------------------------- #
def _tpu_config():
    """Return (vmem_capacity_bytes, num_tensorcores, vpu_lacks_bf16)."""
    try:
        cap = int(pltpu.get_tpu_info().vmem_capacity_bytes)
    except Exception:
        cap = 128 * 1024 * 1024
    # v7x: 64 MiB VMEM per TensorCore, 2 TCs/chip.  v5e/v6e: 128 MiB, 1 TC.
    n_tc = 2 if cap <= 64 * 1024 * 1024 else 1
    try:
        kind = jax.devices()[0].device_kind.lower()
    except Exception:
        kind = ""
    vpu_lacks_bf16 = "v5" in kind  # v5e VPU has no native bf16 ALUs
    return cap, n_tc, vpu_lacks_bf16


def _budget(cap, n_tc):
    """(per-block byte budget, scoped vmem_limit_bytes)."""
    # ~8 MiB blocks on every generation: cap//8 on v7x (64 MiB VMEM),
    # cap//16 on v5e/v6e (128 MiB VMEM).
    block_budget = max(1 << 20, cap // (8 if n_tc == 2 else 16))
    # Double-buffered in + out => 4 live blocks (~32 MiB) + headroom (~40 MiB),
    # comfortably under v7x's 64 MiB physical cap.
    vmem_limit = max(16 << 20, min(cap - (16 << 20), 4 * block_budget + (8 << 20)))
    return block_budget, int(vmem_limit)


def _packed_sublanes(dtype):
    """Sublane granularity: 8 rows per 32-bit vreg row; packed dtypes need more."""
    itemsize = jnp.dtype(dtype).itemsize
    return 8 * max(1, 4 // itemsize)


def _pick_width(n, min_rows):
    """Widest lane extent (multiple of 128) dividing n; prefer rows >= min_rows."""
    for w in _WIDTH_CANDIDATES:
        if n % w == 0 and (n // w) >= min_rows:
            return w
    for w in _WIDTH_CANDIDATES:
        if n % w == 0:
            return w
    return None


# --------------------------------------------------------------------------- #
# Kernel body.
# --------------------------------------------------------------------------- #
def _make_scale_kernel(native):
    if native:
        def kernel(scale_ref, x_ref, o_ref):
            # Native-dtype multiply: scalar cast once per tile, pure VPU traffic.
            x = x_ref[...]
            o_ref[...] = x * scale_ref[0].astype(x.dtype)
    else:
        def kernel(scale_ref, x_ref, o_ref):
            # f32 compute path (sub-32-bit dtypes on v5e, whose VPU lacks bf16).
            o_ref[...] = (x_ref[...].astype(jnp.float32) * scale_ref[0]).astype(o_ref.dtype)
    return kernel


def _scale_2d(x2d, scale_arr, *, native, block_budget, vmem_limit, n_tc):
    rows, width = x2d.shape
    itemsize = jnp.dtype(x2d.dtype).itemsize
    sub = _packed_sublanes(x2d.dtype)

    if rows <= sub:
        tm = rows  # full-extent block on the sublane axis (tiny input)
    else:
        tm_budget = max(sub, (block_budget // (width * itemsize)) // sub * sub)
        rows_up = -(-rows // sub) * sub
        tm = min(tm_budget, rows_up)
        if n_tc > 1:
            # 2-TC chips: keep >= 2 grid steps so both cores stream; never
            # shrink tiles further than that.
            half = (rows + 1) // 2
            tm_half = max(sub, -(-half // sub) * sub)
            tm = min(tm, tm_half)

    grid = (pl.cdiv(rows, tm),)
    n = rows * width

    return pl.pallas_call(
        _make_scale_kernel(native),
        out_shape=jax.ShapeDtypeStruct((rows, width), x2d.dtype),
        grid_spec=pltpu.PrefetchScalarGridSpec(
            num_scalar_prefetch=1,
            grid=grid,
            in_specs=[pl.BlockSpec((tm, width), lambda i, s: (i, 0))],
            out_specs=pl.BlockSpec((tm, width), lambda i, s: (i, 0)),
        ),
        compiler_params=pltpu.CompilerParams(
            dimension_semantics=("parallel",),
            vmem_limit_bytes=vmem_limit,
        ),
        cost_estimate=pl.CostEstimate(
            flops=n, transcendentals=0, bytes_accessed=2 * n * itemsize),
    )(scale_arr, x2d)


# --------------------------------------------------------------------------- #
# Public forward.
# --------------------------------------------------------------------------- #
def unbalanced_weight_forward(x, eps, rho):
    """y = (rho + eps/2) * x, computed in a Pallas TPU kernel."""
    scale_val = rho + eps / 2.0
    orig_shape = x.shape
    flat = x.reshape(-1)  # contiguous -> free reshape, no copy
    n = flat.shape[0]

    if n == 0:
        return x

    if n % _LANES != 0 or not jnp.issubdtype(x.dtype, jnp.floating):
        # Non-lane-aligned (or non-float) inputs: one fused XLA elementwise pass
        # is already at the HBM roofline; avoid a prefix-kernel + concatenate
        # (which would re-read and re-write the whole output).
        return (x * jnp.asarray(scale_val, dtype=x.dtype)).reshape(orig_shape)

    cap, n_tc, vpu_lacks_bf16 = _tpu_config()
    block_budget, vmem_limit = _budget(cap, n_tc)

    sub = _packed_sublanes(x.dtype)
    w = _pick_width(n, sub)  # always found: n % 128 == 0 here

    itemsize = jnp.dtype(x.dtype).itemsize
    # Native multiply for >=32-bit floats everywhere and for bf16/f16 on
    # bf16-capable VPUs (v6e/v7x); f32-compute fallback only on v5e half types.
    native = not (vpu_lacks_bf16 and itemsize < 4)

    # TODO(synk): scale constant is carried as f32 in SMEM; f64 inputs keep f64
    # data precision but see the scale rounded to f32 (negligible, documented).
    scale = jnp.asarray([scale_val], dtype=jnp.float32)

    y2d = _scale_2d(flat.reshape(n // w, w), scale, native=native,
                    block_budget=block_budget, vmem_limit=vmem_limit, n_tc=n_tc)
    return y2d.reshape(orig_shape)


if __name__ == "__main__":
    # Module "parameters": eps, rho are plain scalars from __init__.
    eps = 0.05
    rho = 1.0
    scale_ref_val = rho + eps / 2.0

    key = jax.random.PRNGKey(0)
    k0, k1, k2, k3, k4 = jax.random.split(key, 5)

    # Primary small NCHW-style input consistent with the module's elementwise use.
    x = jax.random.normal(k0, (2, 4, 16, 16), dtype=jnp.float32)
    y = jax.block_until_ready(unbalanced_weight_forward(x, eps, rho))
    assert y.shape == x.shape and y.dtype == x.dtype
    assert jnp.allclose(y, scale_ref_val * x, rtol=1e-6, atol=1e-6)

    # Lane-aligned but few rows (exercises the tiny-rows / full-extent block path).
    x1 = jax.random.normal(k1, (2, 3, 8, 32), dtype=jnp.float32)   # 1536 elems
    y1 = jax.block_until_ready(unbalanced_weight_forward(x1, eps, rho))
    assert jnp.allclose(y1, scale_ref_val * x1, rtol=1e-6, atol=1e-6)

    # Wide-lane, multi-step-grid path.
    x2 = jax.random.normal(k2, (8, 16, 32, 32), dtype=jnp.float32)
    y2 = jax.block_until_ready(unbalanced_weight_forward(x2, eps, rho))
    assert jnp.allclose(y2, scale_ref_val * x2, rtol=1e-6, atol=1e-6)

    # bf16 path (native multiply on v6e/v7x, f32-compute on v5e).
    x3 = jax.random.normal(k3, (4, 8, 16, 16), dtype=jnp.bfloat16)
    y3 = jax.block_until_ready(unbalanced_weight_forward(x3, eps, rho))
    assert y3.dtype == jnp.bfloat16
    ref3 = (x3.astype(jnp.float32) * scale_ref_val).astype(jnp.bfloat16)
    assert jnp.allclose(y3.astype(jnp.float32), ref3.astype(jnp.float32),
                        rtol=2e-2, atol=2e-2)

    # Non-lane-aligned element count -> single fused XLA pass fallback.
    x4 = jax.random.normal(k4, (5, 7, 3), dtype=jnp.float32)  # 105 elems
    y4 = jax.block_until_ready(unbalanced_weight_forward(x4, eps, rho))
    assert jnp.allclose(y4, scale_ref_val * x4, rtol=1e-6, atol=1e-6)

    print("KERNEL_OK")
</pallas_src>

<mosaic_0001>
module attributes {stable_mosaic.version = 11 : i64} {
  func.func @kernel(%arg0: i32, %arg1: memref<1xf32, #tpu.memory_space<smem>>, %arg2: memref<8x256xf32, #tpu.memory_space<vmem>>, %arg3: memref<8x256xf32, #tpu.memory_space<vmem>>) attributes {dimension_semantics = [#tpu.dimension_semantics<parallel>], iteration_bounds = array<i64: 1>, scalar_prefetch = 1 : i64, scratch_operands = 0 : i64, tpu.core_type = #tpu.core_type<tc>, window_params = [{transform_indices = @transform_0, window_bounds = array<i64: 8, 256>}, {transform_indices = @transform_1, window_bounds = array<i64: 8, 256>}]} {
    %c0 = arith.constant 0 : index
    %c0_0 = arith.constant 0 : index
    %0 = vector.load %arg2[%c0, %c0_0] : memref<8x256xf32, #tpu.memory_space<vmem>>, vector<8x256xf32>
    %c0_1 = arith.constant 0 : index
    %1 = memref.load %arg1[%c0_1] : memref<1xf32, #tpu.memory_space<smem>>
    %2 = vector.broadcast %1 : f32 to vector<8x256xf32>
    %3 = arith.mulf %0, %2 : vector<8x256xf32>
    %c0_2 = arith.constant 0 : index
    %c0_3 = arith.constant 0 : index
    %4 = vector.load %arg3[%c0_2, %c0_3] : memref<8x256xf32, #tpu.memory_space<vmem>>, vector<8x256xf32>
    tpu.vector_store %arg3[%c0_2, %c0_3], %3 {strides = array<i32>} : memref<8x256xf32, #tpu.memory_space<vmem>>, vector<8x256xf32>,
    return
  }
  func.func @transform_0(%arg0: i32, %arg1: memref<1xf32, #tpu.memory_space<smem>>) -> (i32, i32) {
    %c0_i32 = arith.constant 0 : i32
    %c0_i32_0 = arith.constant 0 : i32
    return %arg0, %c0_i32 : i32, i32
  }
  func.func @transform_1(%arg0: i32, %arg1: memref<1xf32, #tpu.memory_space<smem>>) -> (i32, i32) {
    %c0_i32 = arith.constant 0 : i32
    %c0_i32_0 = arith.constant 0 : i32
    return %arg0, %c0_i32 : i32, i32
  }
}

</mosaic_0001>

<llo_original>
// kernel: tpu_custom_call.1
$region0: #{tpu_custom_call.1}
  #allocation0 [shape = 'u32[]', space=smem, size = 0x4, offset = 0x4, fixed_abs, tag = 'smem constant byte address 0x4 - core index']
  #allocation1 [shape = 'u32[144,128]{1,0:T(1,128)}', space=vmem, size = 0x12000, scoped, tag = 'internal scratch']
  #allocation2 [shape = 's32[1]{0}', space=sflag, size = 0x4, scoped, tag = 'scoped memory for tpu_custom_call.1']
  #allocation3 [shape = 'f32[1]{0:T(128)S(6)}', space=smem, size = 0x200, scoped, tag = 'prefetched SMEM operand 0']
  %s0 = inlined_call_operand.<no memory space> [shape: f32[1], index: 0, kind: input, shape index: {}]
  %s1 = inlined_call_operand.hbm [shape: f32[8,256], index: 1, kind: input, shape index: {}]
  %s2 = inlined_call_operand.hbm [shape: f32[8,256], index: 2, kind: output, shape index: {}]
  %s3 = sld [smem:[#allocation0]]
  $region18: #{tpu_custom_call.1} parent=0
    _
  %s5 = ssub.s32 1, %s3
  %s6 = scalar_select 0, %s5, %s3
  %7 = sst [smem:[#allocation3]] %s0
  $region1: #{tpu_custom_call.1} parent=0
    #allocation4 [shape = 'u8[8192]{0}', space=vmem, size = 0x2000, scoped, tag = 'input window, operand 1, single buffered']
    #allocation5 [shape = 's32[1]{0}', space=sflag, size = 0x4, scoped, tag = 'scoped memory for tpu_custom_call.1']
    #allocation6 [shape = 's32[1]{0}', space=sflag, size = 0x4, scoped, tag = 'scoped memory for tpu_custom_call.1']
    #allocation7 [shape = 'u8[8192]{0}', space=vmem, size = 0x2000, scoped, tag = 'output window, operand 0, single buffered']
    %8 = vsyncpa [#allocation5], 0
    %9 = vsyncpa [#allocation6], 0
    // Predicated region
    $region2: #{tpu_custom_call.1} parent=1 // pred_check
      _
    $region3: #{tpu_custom_call.1} parent=1 // pred_check_branch
      %11 = sbr.rel (0) target = $region5
    $region4: #{tpu_custom_call.1} parent=1 // pred_region
      %s13 = ssub.s32 256, 256
      %14 = vsyncadd [#allocation5], %s13
      %s16 = sshll.u32 [#allocation4], 4
      %s17 = int_to_ptr.vmem [resolvable:$true] %s16
      %19 = dma.hbm_to_vmem [thread:$0]  %s1, 256, %s17, [#allocation5]
    $region5: #{tpu_custom_call.1} parent=1 // pred_fallthru
      _
    // Predicated region
    $region6: #{tpu_custom_call.1} parent=1 // pred_check
      _
    $region7: #{tpu_custom_call.1} parent=1 // pred_check_branch
      %21 = sbr.rel (0) target = $region9
    $region8: #{tpu_custom_call.1} parent=1 // pred_region
      %22 = dma.done [#allocation5], 256
    $region9: #{tpu_custom_call.1} parent=1 // pred_fallthru
      _
    %v23 = vld [vmem:[#allocation4] sm:$0xff]
    %v24 = vld [vmem:[#allocation4 + $0x8] sm:$0xff]
    %s25 = sld [smem:[#allocation3]]
    %v26 = vstv %s25
    %v27 = vmul.f32 %v23, %v26
    %v28 = vmul.f32 %v24, %v26
    %29 = vst [vmem:[#allocation7] sm:$0xff] %v27
    %30 = vst [vmem:[#allocation7 + $0x8] sm:$0xff] %v28
    // Predicated region
    $region10: #{tpu_custom_call.1} parent=1 // pred_check
      _
    $region11: #{tpu_custom_call.1} parent=1 // pred_check_branch
      %32 = sbr.rel (0) target = $region13
    $region12: #{tpu_custom_call.1} parent=1 // pred_region
      %s34 = ssub.s32 256, 256
      %35 = vsyncadd [#allocation6], %s34
      %s37 = sshll.u32 [#allocation7], 4
      %s38 = int_to_ptr.vmem [resolvable:$true] %s37
      %40 = dma.vmem_to_hbm [thread:$0]  %s38, 256, %s2, [#allocation6]
    $region13: #{tpu_custom_call.1} parent=1 // pred_fallthru
      _
    // Predicated region
    $region14: #{tpu_custom_call.1} parent=1 // pred_check
      _
    $region15: #{tpu_custom_call.1} parent=1 // pred_check_branch
      %42 = sbr.rel (0) target = $region17
    $region16: #{tpu_custom_call.1} parent=1 // pred_region
      %43 = dma.done [#allocation6], 256
    $region17: #{tpu_custom_call.1} parent=1 // pred_fallthru
      _
    %44 = vsyncpa [#allocation5], 1
    %45 = vsyncpa [#allocation6], 1

</llo_original>
